<compile_context>
chip_gen: v7x
topology: tpu7x:2x2x1
jax: 0.10.0
libtpu: 0.0.40
codegen_flags: <defaults>
</compile_context>

<pallas_src>
import math
import jax
import jax.numpy as jnp
from jax import lax
from jax.experimental import pallas as pl
from jax.experimental.pallas import tpu as pltpu


# ----------------------------- kernels ------------------------------------ #

def noisy_linear_kernel(x_ref, wm_ref, ws_ref, wn_ref, bm_ref, bs_ref, bn_ref,
                        o_ref, acc_ref):
    """Training mode: w = wm + ws*wn, b = bm + bs*bn, y = x @ w.T + b."""
    k = pl.program_id(2)

    @pl.when(k == 0)
    def _():
        acc_ref[...] = jnp.zeros_like(acc_ref)

    # Effective noisy weight tile (VPU) + matmul with transposed-RHS contraction
    # (MXU consumes it natively; no explicit w.T).
    w = wm_ref[...] + ws_ref[...] * wn_ref[...]                      # (tn, tk)
    acc_ref[...] += lax.dot_general(
        x_ref[...], w,
        dimension_numbers=(((1,), (1,)), ((), ())),
        preferred_element_type=jnp.float32)                          # (tm, tn)

    @pl.when(k == pl.num_programs(2) - 1)
    def _():
        b = bm_ref[...] + bs_ref[...] * bn_ref[...]                  # (1, tn)
        o_ref[...] = (acc_ref[...] + b).astype(o_ref.dtype)


def plain_linear_kernel(x_ref, wm_ref, bm_ref, o_ref, acc_ref):
    """Eval mode: y = x @ weight_mean.T + bias_mean (no noise streams)."""
    k = pl.program_id(2)

    @pl.when(k == 0)
    def _():
        acc_ref[...] = jnp.zeros_like(acc_ref)

    acc_ref[...] += lax.dot_general(
        x_ref[...], wm_ref[...],
        dimension_numbers=(((1,), (1,)), ((), ())),
        preferred_element_type=jnp.float32)

    @pl.when(k == pl.num_programs(2) - 1)
    def _():
        o_ref[...] = (acc_ref[...] + bm_ref[...]).astype(o_ref.dtype)


# ----------------------------- wrapper ------------------------------------ #

def _round_up(v, m):
    return ((v + m - 1) // m) * m


def noisy_linear(x, weight_mean, weight_std, weight_noise,
                 bias_mean, bias_std, bias_noise, *, training=True,
                 tm=256, tn=256, tk=512):
    """Pallas TPU implementation of NoisyLinear.forward."""
    orig_shape = x.shape
    in_features = orig_shape[-1]
    out_features = weight_mean.shape[0]

    x2 = x.reshape(-1, in_features)
    batch = x2.shape[0]

    # Clamp tiles to the padded problem size; keep (8,128) alignment and
    # lane-dense (multiple-of-128) N / K tiles.
    tm = min(tm, _round_up(batch, 8))
    tn = min(tn, _round_up(out_features, 128))
    tk = min(tk, _round_up(in_features, 128))

    Mp = _round_up(batch, tm)
    Np = _round_up(out_features, tn)
    Kp = _round_up(in_features, tk)

    def pad2(a, rows, cols):
        return jnp.pad(a, ((0, rows - a.shape[0]), (0, cols - a.shape[1])))

    xp = pad2(x2, Mp, Kp)
    wm = pad2(weight_mean, Np, Kp)
    bm = pad2(bias_mean.reshape(1, -1), 1, Np)

    grid = (Mp // tm, Np // tn, Kp // tk)
    x_spec = pl.BlockSpec((tm, tk), lambda i, j, k: (i, k))
    w_spec = pl.BlockSpec((tn, tk), lambda i, j, k: (j, k))
    b_spec = pl.BlockSpec((1, tn), lambda i, j, k: (0, j))
    o_spec = pl.BlockSpec((tm, tn), lambda i, j, k: (i, j))

    compiler_params = pltpu.CompilerParams(
        dimension_semantics=("parallel", "parallel", "arbitrary"))

    n_w_streams = 3 if training else 1
    itemsize = jnp.dtype(x.dtype).itemsize
    cost = pl.CostEstimate(
        flops=2 * Mp * Np * Kp,
        transcendentals=0,
        bytes_accessed=itemsize * (n_w_streams * Np * Kp + Mp * Kp + Mp * Np
                                   + n_w_streams * Np))

    if training:
        ws = pad2(weight_std, Np, Kp)
        wn = pad2(weight_noise, Np, Kp)
        bs = pad2(bias_std.reshape(1, -1), 1, Np)
        bn = pad2(bias_noise.reshape(1, -1), 1, Np)
        out = pl.pallas_call(
            noisy_linear_kernel,
            out_shape=jax.ShapeDtypeStruct((Mp, Np), x.dtype),
            grid_spec=pltpu.PrefetchScalarGridSpec(
                num_scalar_prefetch=0,
                grid=grid,
                in_specs=[x_spec, w_spec, w_spec, w_spec,
                          b_spec, b_spec, b_spec],
                out_specs=o_spec,
                scratch_shapes=[pltpu.VMEM((tm, tn), jnp.float32)]),
            compiler_params=compiler_params,
            cost_estimate=cost,
        )(xp, wm, ws, wn, bm, bs, bn)
    else:
        # Eval mode: only weight_mean / bias_mean are streamed (1/3 the bytes).
        out = pl.pallas_call(
            plain_linear_kernel,
            out_shape=jax.ShapeDtypeStruct((Mp, Np), x.dtype),
            grid_spec=pltpu.PrefetchScalarGridSpec(
                num_scalar_prefetch=0,
                grid=grid,
                in_specs=[x_spec, w_spec, b_spec],
                out_specs=o_spec,
                scratch_shapes=[pltpu.VMEM((tm, tn), jnp.float32)]),
            compiler_params=compiler_params,
            cost_estimate=cost,
        )(xp, wm, bm)

    y = out[:batch, :out_features]
    return y.reshape(*orig_shape[:-1], out_features)


# ----------------------------- init helpers -------------------------------- #

def init_noisy_linear_params(key, in_features, out_features, dtype=jnp.float32):
    """Deterministic parameter init mirroring reset_parameters() / reset_noise()."""
    k_wm, k_bm, k_wn = jax.random.split(key, 3)
    rng_w = math.sqrt(3.0 / in_features)
    rng_n = math.sqrt(1.0 / out_features)
    weight_mean = jax.random.uniform(
        k_wm, (out_features, in_features), dtype, minval=-rng_w, maxval=rng_w)
    weight_std = jnp.full((out_features, in_features), 0.017, dtype)
    bias_mean = jax.random.uniform(
        k_bm, (out_features,), dtype, minval=-rng_w, maxval=rng_w)
    bias_std = jnp.full((out_features,), 0.017, dtype)
    weight_noise = jax.random.uniform(
        k_wn, (out_features, in_features), dtype, minval=-rng_n, maxval=rng_n)
    bias_noise = jnp.full((out_features,), 0.5 * rng_n, dtype)
    return weight_mean, weight_std, bias_mean, bias_std, weight_noise, bias_noise


# ----------------------------- demo / check -------------------------------- #

if __name__ == "__main__":
    key = jax.random.PRNGKey(0)
    batch, in_features, out_features = 8, 32, 16

    k_params, k_x = jax.random.split(key)
    (weight_mean, weight_std, bias_mean, bias_std,
     weight_noise, bias_noise) = init_noisy_linear_params(
        k_params, in_features, out_features)
    x = jax.random.normal(k_x, (batch, in_features), jnp.float32)

    # Training-mode forward (noisy weights).
    y_train = noisy_linear(x, weight_mean, weight_std, weight_noise,
                           bias_mean, bias_std, bias_noise, training=True)
    y_train = jax.block_until_ready(y_train)

    # Eval-mode forward (mean weights only).
    y_eval = noisy_linear(x, weight_mean, weight_std, weight_noise,
                          bias_mean, bias_std, bias_noise, training=False)
    y_eval = jax.block_until_ready(y_eval)

    # Pure-JAX references.
    w_ref = weight_mean + weight_std * weight_noise
    b_ref = bias_mean + bias_std * bias_noise
    y_train_ref = x @ w_ref.T + b_ref
    y_eval_ref = x @ weight_mean.T + bias_mean

    assert y_train.shape == (batch, out_features)
    assert y_eval.shape == (batch, out_features)
    assert jnp.allclose(y_train, y_train_ref, atol=1e-5, rtol=1e-5)
    assert jnp.allclose(y_eval, y_eval_ref, atol=1e-5, rtol=1e-5)

    print("KERNEL_OK")
</pallas_src>

<mosaic_0001>
module attributes {stable_mosaic.version = 11 : i64} {
  func.func @noisy_linear_kernel(%arg0: i32, %arg1: i32, %arg2: i32, %arg3: memref<8x128xf32, #tpu.memory_space<vmem>>, %arg4: memref<128x128xf32, #tpu.memory_space<vmem>>, %arg5: memref<128x128xf32, #tpu.memory_space<vmem>>, %arg6: memref<128x128xf32, #tpu.memory_space<vmem>>, %arg7: memref<1x128xf32, #tpu.memory_space<vmem>>, %arg8: memref<1x128xf32, #tpu.memory_space<vmem>>, %arg9: memref<1x128xf32, #tpu.memory_space<vmem>>, %arg10: memref<8x128xf32, #tpu.memory_space<vmem>>, %arg11: memref<8x128xf32, #tpu.memory_space<vmem>>) attributes {dimension_semantics = [#tpu.dimension_semantics<parallel>, #tpu.dimension_semantics<parallel>, #tpu.dimension_semantics<arbitrary>], iteration_bounds = array<i64: 1, 1, 1>, scalar_prefetch = 0 : i64, scratch_operands = 1 : i64, tpu.core_type = #tpu.core_type<tc>, window_params = [{transform_indices = @transform_0, window_bounds = array<i64: 8, 128>}, {transform_indices = @transform_1, window_bounds = array<i64: 128, 128>}, {transform_indices = @transform_2, window_bounds = array<i64: 128, 128>}, {transform_indices = @transform_3, window_bounds = array<i64: 128, 128>}, {transform_indices = @transform_4, window_bounds = array<i64: 1, 128>}, {transform_indices = @transform_5, window_bounds = array<i64: 1, 128>}, {transform_indices = @transform_6, window_bounds = array<i64: 1, 128>}, {transform_indices = @transform_7, window_bounds = array<i64: 8, 128>}]} {
    %c0_i32 = arith.constant 0 : i32
    %0 = arith.cmpi eq, %arg2, %c0_i32 : i32
    %1 = arith.extui %0 : i1 to i32
    %c0_i32_0 = arith.constant 0 : i32
    %2 = arith.cmpi ne, %1, %c0_i32_0 : i32
    scf.if %2 {
      %cst_14 = arith.constant 0.000000e+00 : f32
      %16 = vector.broadcast %cst_14 : f32 to vector<8x128xf32>
      %c0_15 = arith.constant 0 : index
      %c0_16 = arith.constant 0 : index
      %17 = vector.load %arg11[%c0_15, %c0_16] : memref<8x128xf32, #tpu.memory_space<vmem>>, vector<8x128xf32>
      tpu.vector_store %arg11[%c0_15, %c0_16], %16 {strides = array<i32>} : memref<8x128xf32, #tpu.memory_space<vmem>>, vector<8x128xf32>,
    } else {
    }
    %c0 = arith.constant 0 : index
    %c0_1 = arith.constant 0 : index
    %3 = vector.load %arg4[%c0, %c0_1] : memref<128x128xf32, #tpu.memory_space<vmem>>, vector<128x128xf32>
    %c0_2 = arith.constant 0 : index
    %c0_3 = arith.constant 0 : index
    %4 = vector.load %arg5[%c0_2, %c0_3] : memref<128x128xf32, #tpu.memory_space<vmem>>, vector<128x128xf32>
    %c0_4 = arith.constant 0 : index
    %c0_5 = arith.constant 0 : index
    %5 = vector.load %arg6[%c0_4, %c0_5] : memref<128x128xf32, #tpu.memory_space<vmem>>, vector<128x128xf32>
    %6 = arith.mulf %4, %5 : vector<128x128xf32>
    %7 = arith.addf %3, %6 : vector<128x128xf32>
    %c0_6 = arith.constant 0 : index
    %c0_7 = arith.constant 0 : index
    %8 = vector.load %arg11[%c0_6, %c0_7] : memref<8x128xf32, #tpu.memory_space<vmem>>, vector<8x128xf32>
    %c0_8 = arith.constant 0 : index
    %c0_9 = arith.constant 0 : index
    %9 = vector.load %arg3[%c0_8, %c0_9] : memref<8x128xf32, #tpu.memory_space<vmem>>, vector<8x128xf32>
    %cst = arith.constant dense<0.000000e+00> : vector<8x128xf32>
    %10 = tpu.matmul %9, %7, %cst {dimension_numbers = #tpu.dot_dimension_numbers<[1], [1], [0], [0], [0, 0, 1, 0], [], []>} : vector<8x128xf32>, vector<128x128xf32>, vector<8x128xf32> -> vector<8x128xf32>
    %11 = arith.addf %8, %10 : vector<8x128xf32>
    %c0_10 = arith.constant 0 : index
    %c0_11 = arith.constant 0 : index
    %12 = vector.load %arg11[%c0_10, %c0_11] : memref<8x128xf32, #tpu.memory_space<vmem>>, vector<8x128xf32>
    tpu.vector_store %arg11[%c0_10, %c0_11], %11 {strides = array<i32>} : memref<8x128xf32, #tpu.memory_space<vmem>>, vector<8x128xf32>,
    %c0_i32_12 = arith.constant 0 : i32
    %13 = arith.cmpi eq, %arg2, %c0_i32_12 : i32
    %14 = arith.extui %13 : i1 to i32
    %c0_i32_13 = arith.constant 0 : i32
    %15 = arith.cmpi ne, %14, %c0_i32_13 : i32
    scf.if %15 {
      %c0_14 = arith.constant 0 : index
      %c0_15 = arith.constant 0 : index
      %16 = vector.load %arg7[%c0_14, %c0_15] : memref<1x128xf32, #tpu.memory_space<vmem>>, vector<1x128xf32>
      %c0_16 = arith.constant 0 : index
      %c0_17 = arith.constant 0 : index
      %17 = vector.load %arg8[%c0_16, %c0_17] : memref<1x128xf32, #tpu.memory_space<vmem>>, vector<1x128xf32>
      %c0_18 = arith.constant 0 : index
      %c0_19 = arith.constant 0 : index
      %18 = vector.load %arg9[%c0_18, %c0_19] : memref<1x128xf32, #tpu.memory_space<vmem>>, vector<1x128xf32>
      %19 = arith.mulf %17, %18 : vector<1x128xf32>
      %20 = arith.addf %16, %19 : vector<1x128xf32>
      %c0_20 = arith.constant 0 : index
      %c0_21 = arith.constant 0 : index
      %21 = vector.load %arg11[%c0_20, %c0_21] : memref<8x128xf32, #tpu.memory_space<vmem>>, vector<8x128xf32>
      %22 = vector.broadcast %20 : vector<1x128xf32> to vector<8x128xf32>
      %23 = arith.addf %21, %22 : vector<8x128xf32>
      %c0_22 = arith.constant 0 : index
      %c0_23 = arith.constant 0 : index
      %24 = vector.load %arg10[%c0_22, %c0_23] : memref<8x128xf32, #tpu.memory_space<vmem>>, vector<8x128xf32>
      tpu.vector_store %arg10[%c0_22, %c0_23], %23 {strides = array<i32>} : memref<8x128xf32, #tpu.memory_space<vmem>>, vector<8x128xf32>,
    } else {
    }
    return
  }
  func.func @transform_0(%arg0: i32, %arg1: i32, %arg2: i32) -> (i32, i32) {
    %c0_i32 = arith.constant 0 : i32
    return %arg0, %arg2 : i32, i32
  }
  func.func @transform_1(%arg0: i32, %arg1: i32, %arg2: i32) -> (i32, i32) {
    %c0_i32 = arith.constant 0 : i32
    return %arg1, %arg2 : i32, i32
  }
  func.func @transform_2(%arg0: i32, %arg1: i32, %arg2: i32) -> (i32, i32) {
    %c0_i32 = arith.constant 0 : i32
    return %arg1, %arg2 : i32, i32
  }
  func.func @transform_3(%arg0: i32, %arg1: i32, %arg2: i32) -> (i32, i32) {
    %c0_i32 = arith.constant 0 : i32
    return %arg1, %arg2 : i32, i32
  }
  func.func @transform_4(%arg0: i32, %arg1: i32, %arg2: i32) -> (i32, i32) {
    %c0_i32 = arith.constant 0 : i32
    %c0_i32_0 = arith.constant 0 : i32
    return %c0_i32, %arg1 : i32, i32
  }
  func.func @transform_5(%arg0: i32, %arg1: i32, %arg2: i32) -> (i32, i32) {
    %c0_i32 = arith.constant 0 : i32
    %c0_i32_0 = arith.constant 0 : i32
    return %c0_i32, %arg1 : i32, i32
  }
  func.func @transform_6(%arg0: i32, %arg1: i32, %arg2: i32) -> (i32, i32) {
    %c0_i32 = arith.constant 0 : i32
    %c0_i32_0 = arith.constant 0 : i32
    return %c0_i32, %arg1 : i32, i32
  }
  func.func @transform_7(%arg0: i32, %arg1: i32, %arg2: i32) -> (i32, i32) {
    %c0_i32 = arith.constant 0 : i32
    return %arg0, %arg1 : i32, i32
  }
}

</mosaic_0001>

<llo_original>
// kernel: tpu_custom_call.1
$region0: #{tpu_custom_call.1}
  #allocation0 [shape = 'u32[]', space=smem, size = 0x4, offset = 0x4, fixed_abs, tag = 'smem constant byte address 0x4 - core index']
  #allocation1 [shape = 'u32[144,128]{1,0:T(1,128)}', space=vmem, size = 0x12000, scoped, tag = 'internal scratch']
  #allocation2 [shape = 'f32[8,128]{1,0:T(8,128)}', space=vmem, size = 0x1000, scoped, tag = 'scratch operand']
  %s0 = inlined_call_operand.hbm [shape: f32[8,128], index: 0, kind: input, shape index: {}]
  %s1 = inlined_call_operand.hbm [shape: f32[128,128], index: 1, kind: input, shape index: {}]
  %s2 = inlined_call_operand.hbm [shape: f32[128,128], index: 2, kind: input, shape index: {}]
  %s3 = inlined_call_operand.hbm [shape: f32[128,128], index: 3, kind: input, shape index: {}]
  %s4 = inlined_call_operand.vmem [shape: f32[1,128], index: 4, kind: input, shape index: {}]
  %s5 = inlined_call_operand.vmem [shape: f32[1,128], index: 5, kind: input, shape index: {}]
  %s6 = inlined_call_operand.vmem [shape: f32[1,128], index: 6, kind: input, shape index: {}]
  %s7 = inlined_call_operand.hbm [shape: f32[8,128], index: 7, kind: output, shape index: {}]
  %s8 = sld [smem:[#allocation0]]
  $region62: #{tpu_custom_call.1} parent=0
    _
  %s10 = ssub.s32 1, %s8
  %s11 = scalar_select 0, %s10, %s8
  $region1: #{tpu_custom_call.1} parent=0
    #allocation3 [shape = 'u8[4096]{0}', space=vmem, size = 0x1000, scoped, tag = 'input window, operand 0, single buffered']
    #allocation4 [shape = 's32[1]{0}', space=sflag, size = 0x4, scoped, tag = 'scoped memory for tpu_custom_call.1']
    #allocation5 [shape = 's32[1]{0}', space=sflag, size = 0x4, scoped, tag = 'scoped memory for tpu_custom_call.1']
    #allocation6 [shape = 'u8[65536]{0}', space=vmem, size = 0x10000, scoped, tag = 'input window, operand 1, single buffered']
    #allocation7 [shape = 's32[1]{0}', space=sflag, size = 0x4, scoped, tag = 'scoped memory for tpu_custom_call.1']
    #allocation8 [shape = 'u8[65536]{0}', space=vmem, size = 0x10000, scoped, tag = 'input window, operand 2, single buffered']
    #allocation9 [shape = 'u8[65536]{0}', space=vmem, size = 0x10000, scoped, tag = 'input window, operand 3, single buffered']
    #allocation10 [shape = 's32[1]{0}', space=sflag, size = 0x4, scoped, tag = 'scoped memory for tpu_custom_call.1']
    #allocation11 [shape = 'u8[4096]{0}', space=vmem, size = 0x1000, scoped, tag = 'output window, operand 0, single buffered']
    %12 = vsyncpa [#allocation4], 0
    %13 = vsyncpa [#allocation7], 0
    %14 = vsyncpa [#allocation10], 0
    %15 = vsyncpa [#allocation5], 0
    // Predicated region
    $region2: #{tpu_custom_call.1} parent=1 // pred_check
      _
    $region3: #{tpu_custom_call.1} parent=1 // pred_check_branch
      %17 = sbr.rel (0) target = $region5
    $region4: #{tpu_custom_call.1} parent=1 // pred_region
      %s19 = ssub.s32 128, 128
      %20 = vsyncadd [#allocation4], %s19
      %s22 = sshll.u32 [#allocation3], 4
      %s23 = int_to_ptr.vmem [resolvable:$true] %s22
      %25 = dma.hbm_to_vmem [thread:$0]  %s0, 128, %s23, [#allocation4]
    $region5: #{tpu_custom_call.1} parent=1 // pred_fallthru
      _
    // Predicated region
    $region6: #{tpu_custom_call.1} parent=1 // pred_check
      _
    $region7: #{tpu_custom_call.1} parent=1 // pred_check_branch
      %27 = sbr.rel (0) target = $region9
    $region8: #{tpu_custom_call.1} parent=1 // pred_region
      %s29 = ssub.s32 2048, 2048
      %30 = vsyncadd [#allocation7], %s29
      %s31 = sshll.u32 [#allocation6], 4
      %s32 = int_to_ptr.vmem [resolvable:$true] %s31
      %37 = dma.hbm_to_vmem [thread:$0]  %s1, 2048, %s32, [#allocation7], 128, 128, 8
    $region9: #{tpu_custom_call.1} parent=1 // pred_fallthru
      _
    // Predicated region
    $region10: #{tpu_custom_call.1} parent=1 // pred_check
      _
    $region11: #{tpu_custom_call.1} parent=1 // pred_check_branch
      %39 = sbr.rel (0) target = $region13
    $region12: #{tpu_custom_call.1} parent=1 // pred_region
      %s41 = ssub.s32 2048, 2048
      %42 = vsyncadd [#allocation7], %s41
      %s43 = sshll.u32 [#allocation8], 4
      %s44 = int_to_ptr.vmem [resolvable:$true] %s43
      %49 = dma.hbm_to_vmem [thread:$0]  %s2, 2048, %s44, [#allocation7], 128, 128, 8
    $region13: #{tpu_custom_call.1} parent=1 // pred_fallthru
      _
    // Predicated region
    $region14: #{tpu_custom_call.1} parent=1 // pred_check
      _
    $region15: #{tpu_custom_call.1} parent=1 // pred_check_branch
      %51 = sbr.rel (0) target = $region17
    $region16: #{tpu_custom_call.1} parent=1 // pred_region
      %s53 = ssub.s32 2048, 2048
      %54 = vsyncadd [#allocation10], %s53
      %s55 = sshll.u32 [#allocation9], 4
      %s56 = int_to_ptr.vmem [resolvable:$true] %s55
      %61 = dma.hbm_to_vmem [thread:$0]  %s3, 2048, %s56, [#allocation10], 128, 128, 8
    $region17: #{tpu_custom_call.1} parent=1 // pred_fallthru
      _
    // Predicated region
    $region18: #{tpu_custom_call.1} parent=1 // pred_check
      _
    $region19: #{tpu_custom_call.1} parent=1 // pred_check_branch
      %63 = sbr.rel (0) target = $region21
    $region20: #{tpu_custom_call.1} parent=1 // pred_region
      _
    $region21: #{tpu_custom_call.1} parent=1 // pred_fallthru
      _
    // Predicated region
    $region22: #{tpu_custom_call.1} parent=1 // pred_check
      _
    $region23: #{tpu_custom_call.1} parent=1 // pred_check_branch
      %65 = sbr.rel (0) target = $region25
    $region24: #{tpu_custom_call.1} parent=1 // pred_region
      _
    $region25: #{tpu_custom_call.1} parent=1 // pred_fallthru
      _
    // Predicated region
    $region26: #{tpu_custom_call.1} parent=1 // pred_check
      _
    $region27: #{tpu_custom_call.1} parent=1 // pred_check_branch
      %67 = sbr.rel (0) target = $region29
    $region28: #{tpu_custom_call.1} parent=1 // pred_region
      _
    $region29: #{tpu_custom_call.1} parent=1 // pred_fallthru
      _
    // Predicated region
    $region30: #{tpu_custom_call.1} parent=1 // pred_check
      _
    $region31: #{tpu_custom_call.1} parent=1 // pred_check_branch
      %69 = sbr.rel (0) target = $region33
    $region32: #{tpu_custom_call.1} parent=1 // pred_region
      %70 = dma.done [#allocation4], 128
    $region33: #{tpu_custom_call.1} parent=1 // pred_fallthru
      _
    // Predicated region
    $region34: #{tpu_custom_call.1} parent=1 // pred_check
      _
    $region35: #{tpu_custom_call.1} parent=1 // pred_check_branch
      %72 = sbr.rel (0) target = $region37
    $region36: #{tpu_custom_call.1} parent=1 // pred_region
      %73 = dma.done [#allocation7], 2048
    $region37: #{tpu_custom_call.1} parent=1 // pred_fallthru
      _
    // Predicated region
    $region38: #{tpu_custom_call.1} parent=1 // pred_check
      _
    $region39: #{tpu_custom_call.1} parent=1 // pred_check_branch
      %75 = sbr.rel (0) target = $region41
    $region40: #{tpu_custom_call.1} parent=1 // pred_region
      %76 = dma.done [#allocation7], 2048
    $region41: #{tpu_custom_call.1} parent=1 // pred_fallthru
      _
    // Predicated region
    $region42: #{tpu_custom_call.1} parent=1 // pred_check
      _
    $region43: #{tpu_custom_call.1} parent=1 // pred_check_branch
      %78 = sbr.rel (0) target = $region45
    $region44: #{tpu_custom_call.1} parent=1 // pred_region
      %79 = dma.done [#allocation10], 2048
    $region45: #{tpu_custom_call.1} parent=1 // pred_fallthru
      _
    %p80 = scmp.eq.s32.totalorder 0, 0
    // Predicated region
    $region46: #{tpu_custom_call.1} parent=1 // pred_check
      %p81 = pneg %p80
    $region47: #{tpu_custom_call.1} parent=1 // pred_check_branch
      %83 = sbr.rel (%p81) target = $region49
    $region48: #{tpu_custom_call.1} parent=1 // pred_region
      %84 = vst [vmem:[#allocation2] sm:$0xff] 0.0
    $region49: #{tpu_custom_call.1} parent=1 // pred_fallthru
      _
    %v85 = vld [vmem:[#allocation6] sm:$0xff]
    %v86 = vld [vmem:[#allocation6 + $0x8] sm:$0xff]
    %v87 = vld [vmem:[#allocation6 + $0x10] sm:$0xff]
    %v88 = vld [vmem:[#allocation6 + $0x18] sm:$0xff]
    %v89 = vld [vmem:[#allocation6 + $0x20] sm:$0xff]
    %v90 = vld [vmem:[#allocation6 + $0x28] sm:$0xff]
    %v91 = vld [vmem:[#allocation6 + $0x30] sm:$0xff]
    %v92 = vld [vmem:[#allocation6 + $0x38] sm:$0xff]
    %v93 = vld [vmem:[#allocation6 + $0x40] sm:$0xff]
    %v94 = vld [vmem:[#allocation6 + $0x48] sm:$0xff]
    %v95 = vld [vmem:[#allocation6 + $0x50] sm:$0xff]
    %v96 = vld [vmem:[#allocation6 + $0x58] sm:$0xff]
    %v97 = vld [vmem:[#allocation6 + $0x60] sm:$0xff]
    %v98 = vld [vmem:[#allocation6 + $0x68] sm:$0xff]
    %v99 = vld [vmem:[#allocation6 + $0x70] sm:$0xff]
    %v100 = vld [vmem:[#allocation6 + $0x78] sm:$0xff]
    %v101 = vld [vmem:[#allocation8] sm:$0xff]
    %v102 = vld [vmem:[#allocation8 + $0x8] sm:$0xff]
    %v103 = vld [vmem:[#allocation8 + $0x10] sm:$0xff]
    %v104 = vld [vmem:[#allocation8 + $0x18] sm:$0xff]
    %v105 = vld [vmem:[#allocation8 + $0x20] sm:$0xff]
    %v106 = vld [vmem:[#allocation8 + $0x28] sm:$0xff]
    %v107 = vld [vmem:[#allocation8 + $0x30] sm:$0xff]
    %v108 = vld [vmem:[#allocation8 + $0x38] sm:$0xff]
    %v109 = vld [vmem:[#allocation8 + $0x40] sm:$0xff]
    %v110 = vld [vmem:[#allocation8 + $0x48] sm:$0xff]
    %v111 = vld [vmem:[#allocation8 + $0x50] sm:$0xff]
    %v112 = vld [vmem:[#allocation8 + $0x58] sm:$0xff]
    %v113 = vld [vmem:[#allocation8 + $0x60] sm:$0xff]
    %v114 = vld [vmem:[#allocation8 + $0x68] sm:$0xff]
    %v115 = vld [vmem:[#allocation8 + $0x70] sm:$0xff]
    %v116 = vld [vmem:[#allocation8 + $0x78] sm:$0xff]
    %v117 = vld [vmem:[#allocation9] sm:$0xff]
    %v118 = vld [vmem:[#allocation9 + $0x8] sm:$0xff]
    %v119 = vld [vmem:[#allocation9 + $0x10] sm:$0xff]
    %v120 = vld [vmem:[#allocation9 + $0x18] sm:$0xff]
    %v121 = vld [vmem:[#allocation9 + $0x20] sm:$0xff]
    %v122 = vld [vmem:[#allocation9 + $0x28] sm:$0xff]
    %v123 = vld [vmem:[#allocation9 + $0x30] sm:$0xff]
    %v124 = vld [vmem:[#allocation9 + $0x38] sm:$0xff]
    %v125 = vld [vmem:[#allocation9 + $0x40] sm:$0xff]
    %v126 = vld [vmem:[#allocation9 + $0x48] sm:$0xff]
    %v127 = vld [vmem:[#allocation9 + $0x50] sm:$0xff]
    %v128 = vld [vmem:[#allocation9 + $0x58] sm:$0xff]
    %v129 = vld [vmem:[#allocation9 + $0x60] sm:$0xff]
    %v130 = vld [vmem:[#allocation9 + $0x68] sm:$0xff]
    %v131 = vld [vmem:[#allocation9 + $0x70] sm:$0xff]
    %v132 = vld [vmem:[#allocation9 + $0x78] sm:$0xff]
    %v133 = vmul.f32 %v101, %v117
    %v134 = vmul.f32 %v102, %v118
    %v135 = vmul.f32 %v103, %v119
    %v136 = vmul.f32 %v104, %v120
    %v137 = vmul.f32 %v105, %v121
    %v138 = vmul.f32 %v106, %v122
    %v139 = vmul.f32 %v107, %v123
    %v140 = vmul.f32 %v108, %v124
    %v141 = vmul.f32 %v109, %v125
    %v142 = vmul.f32 %v110, %v126
    %v143 = vmul.f32 %v111, %v127
    %v144 = vmul.f32 %v112, %v128
    %v145 = vmul.f32 %v113, %v129
    %v146 = vmul.f32 %v114, %v130
    %v147 = vmul.f32 %v115, %v131
    %v148 = vmul.f32 %v116, %v132
    %v149 = vadd.f32 %v85, %v133
    %v150 = vadd.f32 %v86, %v134
    %v151 = vadd.f32 %v87, %v135
    %v152 = vadd.f32 %v88, %v136
    %v153 = vadd.f32 %v89, %v137
    %v154 = vadd.f32 %v90, %v138
    %v155 = vadd.f32 %v91, %v139
    %v156 = vadd.f32 %v92, %v140
    %v157 = vadd.f32 %v93, %v141
    %v158 = vadd.f32 %v94, %v142
    %v159 = vadd.f32 %v95, %v143
    %v160 = vadd.f32 %v96, %v144
    %v161 = vadd.f32 %v97, %v145
    %v162 = vadd.f32 %v98, %v146
    %v163 = vadd.f32 %v99, %v147
    %v164 = vadd.f32 %v100, %v148
    %v165 = vld [vmem:[#allocation2] sm:$0xff]
    %v166 = vld [vmem:[#allocation3] sm:$0xff]
    %167 = vmatprep.subr.mxu0 0.0
    %168 = vmatpush1.xpose.msra.mxu0 %v149
    %169 = vmatprep.subr.mxu0 0.0
    %170 = vmatpush1.xpose.msra.mxu0 %v150
    %171 = vmatprep.subr.mxu0 0.0
    %172 = vmatpush1.xpose.msra.mxu0 %v151
    %173 = vmatprep.subr.mxu0 0.0
    %174 = vmatpush1.xpose.msra.mxu0 %v152
    %175 = vmatprep.subr.mxu0 0.0
    %176 = vmatpush1.xpose.msra.mxu0 %v153
    %177 = vmatprep.subr.mxu0 0.0
    %178 = vmatpush1.xpose.msra.mxu0 %v154
    %179 = vmatprep.subr.mxu0 0.0
    %180 = vmatpush1.xpose.msra.mxu0 %v155
    %181 = vmatprep.subr.mxu0 0.0
    %182 = vmatpush1.xpose.msra.mxu0 %v156
    %183 = vmatprep.subr.mxu0 0.0
    %184 = vmatpush1.xpose.msra.mxu0 %v157
    %185 = vmatprep.subr.mxu0 0.0
    %186 = vmatpush1.xpose.msra.mxu0 %v158
    %187 = vmatprep.subr.mxu0 0.0
    %188 = vmatpush1.xpose.msra.mxu0 %v159
    %189 = vmatprep.subr.mxu0 0.0
    %190 = vmatpush1.xpose.msra.mxu0 %v160
    %191 = vmatprep.subr.mxu0 0.0
    %192 = vmatpush1.xpose.msra.mxu0 %v161
    %193 = vmatprep.subr.mxu0 0.0
    %194 = vmatpush1.xpose.msra.mxu0 %v162
    %195 = vmatprep.subr.mxu0 0.0
    %196 = vmatpush1.xpose.msra.mxu0 %v163
    %197 = vmatprep.subr.mxu0 0.0
    %198 = vmatpush1.xpose.msra.mxu0 %v164
    %199 = vmatprep.subr.mxu0 0.0
    %200 = vmatpush1.xpose.msra.mxu0 0.0
    %201 = vmatprep.subr.mxu0 0.0
    %202 = vmatpush1.xpose.msra.mxu0 0.0
    %203 = vmatprep.subr.mxu0 0.0
    %204 = vmatpush1.xpose.msra.mxu0 0.0
    %205 = vmatprep.subr.mxu0 0.0
    %206 = vmatpush1.xpose.msra.mxu0 0.0
    %207 = vmatprep.subr.mxu0 0.0
    %208 = vmatpush1.xpose.msra.mxu0 0.0
    %209 = vmatprep.subr.mxu0 0.0
    %210 = vmatpush1.xpose.msra.mxu0 0.0
    %211 = vmatprep.subr.mxu0 0.0
    %212 = vmatpush1.xpose.msra.mxu0 0.0
    %213 = vmatprep.subr.mxu0 0.0
    %214 = vmatpush1.xpose.msra.mxu0 0.0
    %215 = vmatprep.subr.mxu0 0.0
    %216 = vmatpush1.xpose.msra.mxu0 0.0
    %217 = vmatprep.subr.mxu0 0.0
    %218 = vmatpush1.xpose.msra.mxu0 0.0
    %219 = vmatprep.subr.mxu0 0.0
    %220 = vmatpush1.xpose.msra.mxu0 0.0
    %221 = vmatprep.subr.mxu0 0.0
    %222 = vmatpush1.xpose.msra.mxu0 0.0
    %223 = vmatprep.subr.mxu0 0.0
    %224 = vmatpush1.xpose.msra.mxu0 0.0
    %225 = vmatprep.subr.mxu0 0.0
    %226 = vmatpush1.xpose.msra.mxu0 0.0
    %227 = vmatprep.subr.mxu0 0.0
    %228 = vmatpush1.xpose.msra.mxu0 0.0
    %229 = vmatprep.subr.mxu0 0.0
    %230 = vmatpush1.xpose.msra.mxu0 0.0
    %231 = vmatprep.mubr.f32.mxu0 0.0
    %232 = vmatmul.mubr.f32.gmra.mrb[0].mxu0 %v166
    %v233 = vpop.f32.mrb[0].mxu0
    %v234 = vadd.f32 0.0, %v233
    %v235 = vpop.f32.mrb[0].mxu0
    %236 = vdwg.mxu0
    %v237 = vadd.f32 %v165, %v234
    %238 = vst [vmem:[#allocation2] sm:$0xff] %v237
    // Predicated region
    $region50: #{tpu_custom_call.1} parent=1 // pred_check
      %p239 = pneg %p80
    $region51: #{tpu_custom_call.1} parent=1 // pred_check_branch
      %241 = sbr.rel (%p239) target = $region53
    $region52: #{tpu_custom_call.1} parent=1 // pred_region
      %v242 = vld [vmem:[%s4] sm:$0x1]
      %v243 = vld [vmem:[%s5] sm:$0x1]
      %v244 = vld [vmem:[%s6] sm:$0x1]
      %v245 = vmul.f32 %v243, %v244
      %v246 = vadd.f32 %v242, %v245
      %v247 = vld [vmem:[#allocation2] sm:$0xff]
      %v249 = vlaneseq
      %v250 = vshrl.u32 %v249, 7
      %v251 = vsub.s32 0, %v250
      %v252 = vrot.slane %v246, %v251
      %v254 = vadd.f32 %v247, %v252
      %255 = vst [vmem:[#allocation11] sm:$0xff] %v254
    $region53: #{tpu_custom_call.1} parent=1 // pred_fallthru
      _
    // Predicated region
    $region54: #{tpu_custom_call.1} parent=1 // pred_check
      _
    $region55: #{tpu_custom_call.1} parent=1 // pred_check_branch
      %257 = sbr.rel (0) target = $region57
    $region56: #{tpu_custom_call.1} parent=1 // pred_region
      %s259 = ssub.s32 128, 128
      %260 = vsyncadd [#allocation5], %s259
      %s262 = sshll.u32 [#allocation11], 4
      %s263 = int_to_ptr.vmem [resolvable:$true] %s262
      %265 = dma.vmem_to_hbm [thread:$0]  %s263, 128, %s7, [#allocation5]
    $region57: #{tpu_custom_call.1} parent=1 // pred_fallthru
      _
    // Predicated region
    $region58: #{tpu_custom_call.1} parent=1 // pred_check
      _
    $region59: #{tpu_custom_call.1} parent=1 // pred_check_branch
      %267 = sbr.rel (0) target = $region61
    $region60: #{tpu_custom_call.1} parent=1 // pred_region
      %268 = dma.done [#allocation5], 128
    $region61: #{tpu_custom_call.1} parent=1 // pred_fallthru
      _
    %269 = vsyncpa [#allocation4], 1
    %270 = vsyncpa [#allocation7], 1
    %271 = vsyncpa [#allocation10], 1
    %272 = vsyncpa [#allocation5], 1

</llo_original>
